<compile_context>
chip_gen: v7x
topology: tpu7x:2x2x1
jax: 0.10.0
libtpu: 0.0.40
codegen_flags: <defaults>
</compile_context>

<pallas_src>
import functools

import jax
import jax.numpy as jnp
import numpy as np
from jax.experimental import pallas as pl
from jax.experimental.pallas import tpu as pltpu


def _contrastive_kernel(x_l_ref, x_r_ref, n_col_ref, n_row_ref,
                        s_col_ref, s_row_ref, lab_col_ref, lab_row_ref,
                        out_ref, acc_ref,
                        *, margin, eps, n_features, tm, tn):
    i = pl.program_id(0)
    j = pl.program_id(1)
    k = pl.program_id(2)
    nk = pl.num_programs(2)

    # Row-block output becomes resident when i changes; zero it on the first (j, k) visit.
    @pl.when(jnp.logical_and(j == 0, k == 0))
    def _():
        out_ref[...] = jnp.zeros_like(out_ref)

    # Zero the Gram accumulator at the start of each k-reduction.
    @pl.when(k == 0)
    def _():
        acc_ref[...] = jnp.zeros_like(acc_ref)

    # Gram tile on the MXU: G[a, b] = sum_c x_l[a, c] * x_r[b, c]  (contract last dims,
    # no explicit transpose materialized).  f32 accumulation regardless of input dtype.
    acc_ref[...] += jax.lax.dot_general(
        x_l_ref[...], x_r_ref[...],
        dimension_numbers=(((1,), (1,)), ((), ())),
        preferred_element_type=jnp.float32)

    # Epilogue: only after the full K reduction for this (i, j) tile.
    @pl.when(k == nk - 1)
    def _():
        g = acc_ref[...]                       # (tm, tn) f32
        n_i = n_col_ref[...]                   # (tm, 1)  f32
        n_j = n_row_ref[...]                   # (1, tn)  f32
        s_i = s_col_ref[...]                   # (tm, 1)  f32
        s_j = s_row_ref[...]                   # (1, tn)  f32

        eps32 = jnp.float32(eps)
        # Exact expansion of sum_c (x[j,c] - x[i,c] + eps)^2 (keeps torch eps parity).
        d2 = (n_i + n_j - 2.0 * g
              + 2.0 * eps32 * (s_j - s_i)
              + jnp.float32(n_features) * eps32 * eps32)
        d2 = jnp.maximum(d2, 0.0)              # guard cancellation negatives
        dist = jnp.sqrt(d2)                    # EUP; only needed for the hinge branch
        hinge = jnp.maximum(jnp.float32(margin) - dist, 0.0)

        # Global (i, j) index masks for this tile.
        row = jax.lax.broadcasted_iota(jnp.int32, (tm, tn), 0) + i * tm
        col = jax.lax.broadcasted_iota(jnp.int32, (tm, tn), 1) + j * tn
        valid = row != col
        same = lab_col_ref[...] == lab_row_ref[...]   # (tm, 1) == (1, tn) -> (tm, tn)

        per_pair = jnp.where(valid, jnp.where(same, d2, hinge * hinge), 0.0)
        out_ref[...] += jnp.sum(per_pair, axis=1, keepdims=True)   # per-row partial loss


def _pick_tile(dim, preferred):
    for p in preferred:
        if dim % p == 0:
            return p
    return dim  # full dim is always a legal block


def contrastive_loss(logits, labels, margin=1.0, eps=1e-6):
    """logits: (B, C) float32/bfloat16, labels: (B,) int — returns scalar float32 loss."""
    B, C = logits.shape
    labels = labels.astype(jnp.int32)

    # Cheap O(B*C) row statistics in f32 (fused by XLA; no (B,B,C) intermediate anywhere).
    xf = logits.astype(jnp.float32)
    n = jnp.sum(xf * xf, axis=1)               # (B,) squared norms
    s = jnp.sum(xf, axis=1)                    # (B,) row sums (for the eps correction)
    n_col, n_row = n.reshape(B, 1), n.reshape(1, B)
    s_col, s_row = s.reshape(B, 1), s.reshape(1, B)
    lab_col, lab_row = labels.reshape(B, 1), labels.reshape(1, B)

    # Tile selection: 256-aligned preferred (v6e/v7x MXU), still 128-multiples for v5e;
    # falls back to full dims for small problems (e.g. B=8, C=32 -> single grid step).
    tm = _pick_tile(B, (256, 128, 64, 32, 16, 8))
    tn = _pick_tile(B, (256, 128))             # lane dim of (1, B) operands: 128-mult or full
    tk = _pick_tile(C, (512, 256, 128))
    grid = (B // tm, B // tn, C // tk)

    itemsize = jnp.dtype(logits.dtype).itemsize
    cost = pl.CostEstimate(
        flops=2 * B * B * C,                   # Gram matmul dominates
        transcendentals=B * B,                 # one sqrt per pair
        bytes_accessed=B * C * itemsize * (grid[0] + grid[1]) + 6 * B * 4 + B * 4,
    )

    kernel = functools.partial(
        _contrastive_kernel,
        margin=float(margin), eps=float(eps), n_features=C, tm=tm, tn=tn)

    row_sums = pl.pallas_call(
        kernel,
        out_shape=jax.ShapeDtypeStruct((B, 1), jnp.float32),
        grid_spec=pltpu.PrefetchScalarGridSpec(
            num_scalar_prefetch=0,
            grid=grid,
            in_specs=[
                pl.BlockSpec((tm, tk), lambda i, j, k: (i, k)),   # X as LHS rows
                pl.BlockSpec((tn, tk), lambda i, j, k: (j, k)),   # X as RHS rows
                pl.BlockSpec((tm, 1), lambda i, j, k: (i, 0)),    # n[i]
                pl.BlockSpec((1, tn), lambda i, j, k: (0, j)),    # n[j]
                pl.BlockSpec((tm, 1), lambda i, j, k: (i, 0)),    # s[i]
                pl.BlockSpec((1, tn), lambda i, j, k: (0, j)),    # s[j]
                pl.BlockSpec((tm, 1), lambda i, j, k: (i, 0)),    # labels[i]
                pl.BlockSpec((1, tn), lambda i, j, k: (0, j)),    # labels[j]
            ],
            out_specs=pl.BlockSpec((tm, 1), lambda i, j, k: (i, 0)),
            scratch_shapes=[pltpu.VMEM((tm, tn), jnp.float32)],   # Gram accumulator
        ),
        compiler_params=pltpu.CompilerParams(
            dimension_semantics=("parallel", "arbitrary", "arbitrary")),
        cost_estimate=cost,
    )(logits, logits, n_col, n_row, s_col, s_row, lab_col, lab_row)

    denom = jnp.float32(B * (B - 1))           # == valid.sum()
    return jnp.sum(row_sums) / denom


def _reference_loss(logits, labels, margin=1.0, eps=1e-6, chunk=64):
    """float64 NumPy reference literally mirroring the PyTorch module (chunked over rows)."""
    x = np.asarray(logits, dtype=np.float64)
    labels = np.asarray(labels)
    B = x.shape[0]
    total = 0.0
    for start in range(0, B, chunk):
        stop = min(start + chunk, B)
        diff = x[None, :, :] - x[start:stop, None, :] + eps        # (c, B, C)
        dists = np.sqrt(np.sum(diff * diff, axis=-1))              # (c, B)
        idx_i = np.arange(start, stop)[:, None]
        idx_j = np.arange(B)[None, :]
        valid = idx_i != idx_j
        same = labels[start:stop, None] == labels[None, :]
        mdists = np.maximum(margin - dists, 0.0)
        total += (dists ** 2 * (same & valid) + mdists ** 2 * (~same & valid)).sum()
    return total / float(B * (B - 1))


if __name__ == "__main__":
    key = jax.random.PRNGKey(0)

    # Primary small test (matches the module's expected logits(BxC), labels(B) shapes).
    k1, k2 = jax.random.split(key)
    B, C = 8, 32
    logits = jax.random.normal(k1, (B, C), dtype=jnp.float32)
    labels = jax.random.randint(k2, (B,), 0, 3, dtype=jnp.int32)

    loss = contrastive_loss(logits, labels, margin=1.0)
    loss = jax.block_until_ready(loss)
    ref = _reference_loss(np.asarray(logits), np.asarray(labels), margin=1.0)
    # Gram-matrix formulation in f32 carries a little cancellation error vs the f64 ref.
    assert np.allclose(float(loss), float(ref), rtol=1e-4, atol=1e-4), (float(loss), float(ref))

    # Secondary check exercising the real tiled grid (2 x 2 x 3 grid: tm=tn=256, tk=128).
    k3, k4 = jax.random.split(k2)
    B2, C2 = 512, 384
    logits2 = jax.random.normal(k3, (B2, C2), dtype=jnp.float32)
    labels2 = jax.random.randint(k4, (B2,), 0, 16, dtype=jnp.int32)

    loss2 = contrastive_loss(logits2, labels2, margin=1.0)
    loss2 = jax.block_until_ready(loss2)
    ref2 = _reference_loss(np.asarray(logits2), np.asarray(labels2), margin=1.0)
    assert np.allclose(float(loss2), float(ref2), rtol=1e-3, atol=1e-3), (float(loss2), float(ref2))

    print("KERNEL_OK")
</pallas_src>

<mosaic_0001>
module attributes {stable_mosaic.version = 11 : i64} {
  func.func @_contrastive_kernel(%arg0: i32, %arg1: i32, %arg2: i32, %arg3: memref<8x32xf32, #tpu.memory_space<vmem>>, %arg4: memref<8x32xf32, #tpu.memory_space<vmem>>, %arg5: memref<8x1xf32, #tpu.memory_space<vmem>>, %arg6: memref<1x8xf32, #tpu.memory_space<vmem>>, %arg7: memref<8x1xf32, #tpu.memory_space<vmem>>, %arg8: memref<1x8xf32, #tpu.memory_space<vmem>>, %arg9: memref<8x1xi32, #tpu.memory_space<vmem>>, %arg10: memref<1x8xi32, #tpu.memory_space<vmem>>, %arg11: memref<8x1xf32, #tpu.memory_space<vmem>>, %arg12: memref<8x8xf32, #tpu.memory_space<vmem>>) attributes {dimension_semantics = [#tpu.dimension_semantics<parallel>, #tpu.dimension_semantics<arbitrary>, #tpu.dimension_semantics<arbitrary>], iteration_bounds = array<i64: 1, 1, 1>, scalar_prefetch = 0 : i64, scratch_operands = 1 : i64, tpu.core_type = #tpu.core_type<tc>, window_params = [{transform_indices = @transform_0, window_bounds = array<i64: 8, 32>}, {transform_indices = @transform_1, window_bounds = array<i64: 8, 32>}, {transform_indices = @transform_2, window_bounds = array<i64: 8, 1>}, {transform_indices = @transform_3, window_bounds = array<i64: 1, 8>}, {transform_indices = @transform_4, window_bounds = array<i64: 8, 1>}, {transform_indices = @transform_5, window_bounds = array<i64: 1, 8>}, {transform_indices = @transform_6, window_bounds = array<i64: 8, 1>}, {transform_indices = @transform_7, window_bounds = array<i64: 1, 8>}, {transform_indices = @transform_8, window_bounds = array<i64: 8, 1>}]} {
    %c0_i32 = arith.constant 0 : i32
    %0 = arith.cmpi eq, %arg1, %c0_i32 : i32
    %c0_i32_0 = arith.constant 0 : i32
    %1 = arith.cmpi eq, %arg2, %c0_i32_0 : i32
    %2 = arith.andi %0, %1 : i1
    %3 = arith.extui %2 : i1 to i32
    %c0_i32_1 = arith.constant 0 : i32
    %4 = arith.cmpi ne, %3, %c0_i32_1 : i32
    scf.if %4 {
      %cst_13 = arith.constant 0.000000e+00 : f32
      %17 = vector.broadcast %cst_13 : f32 to vector<8x1xf32>
      %c0_14 = arith.constant 0 : index
      %c0_15 = arith.constant 0 : index
      %18 = vector.load %arg11[%c0_14, %c0_15] : memref<8x1xf32, #tpu.memory_space<vmem>>, vector<8x1xf32>
      tpu.vector_store %arg11[%c0_14, %c0_15], %17 {strides = array<i32>} : memref<8x1xf32, #tpu.memory_space<vmem>>, vector<8x1xf32>,
    } else {
    }
    %c0_i32_2 = arith.constant 0 : i32
    %5 = arith.cmpi eq, %arg2, %c0_i32_2 : i32
    %6 = arith.extui %5 : i1 to i32
    %c0_i32_3 = arith.constant 0 : i32
    %7 = arith.cmpi ne, %6, %c0_i32_3 : i32
    scf.if %7 {
      %cst_13 = arith.constant 0.000000e+00 : f32
      %17 = vector.broadcast %cst_13 : f32 to vector<8x8xf32>
      %c0_14 = arith.constant 0 : index
      %c0_15 = arith.constant 0 : index
      %18 = vector.load %arg12[%c0_14, %c0_15] : memref<8x8xf32, #tpu.memory_space<vmem>>, vector<8x8xf32>
      tpu.vector_store %arg12[%c0_14, %c0_15], %17 {strides = array<i32>} : memref<8x8xf32, #tpu.memory_space<vmem>>, vector<8x8xf32>,
    } else {
    }
    %c0 = arith.constant 0 : index
    %c0_4 = arith.constant 0 : index
    %8 = vector.load %arg12[%c0, %c0_4] : memref<8x8xf32, #tpu.memory_space<vmem>>, vector<8x8xf32>
    %c0_5 = arith.constant 0 : index
    %c0_6 = arith.constant 0 : index
    %9 = vector.load %arg3[%c0_5, %c0_6] : memref<8x32xf32, #tpu.memory_space<vmem>>, vector<8x32xf32>
    %c0_7 = arith.constant 0 : index
    %c0_8 = arith.constant 0 : index
    %10 = vector.load %arg4[%c0_7, %c0_8] : memref<8x32xf32, #tpu.memory_space<vmem>>, vector<8x32xf32>
    %cst = arith.constant dense<0.000000e+00> : vector<8x8xf32>
    %11 = tpu.matmul %9, %10, %cst {dimension_numbers = #tpu.dot_dimension_numbers<[1], [1], [0], [0], [0, 0, 1, 0], [], []>} : vector<8x32xf32>, vector<8x32xf32>, vector<8x8xf32> -> vector<8x8xf32>
    %12 = arith.addf %8, %11 : vector<8x8xf32>
    %c0_9 = arith.constant 0 : index
    %c0_10 = arith.constant 0 : index
    %13 = vector.load %arg12[%c0_9, %c0_10] : memref<8x8xf32, #tpu.memory_space<vmem>>, vector<8x8xf32>
    tpu.vector_store %arg12[%c0_9, %c0_10], %12 {strides = array<i32>} : memref<8x8xf32, #tpu.memory_space<vmem>>, vector<8x8xf32>,
    %c0_i32_11 = arith.constant 0 : i32
    %14 = arith.cmpi eq, %arg2, %c0_i32_11 : i32
    %15 = arith.extui %14 : i1 to i32
    %c0_i32_12 = arith.constant 0 : i32
    %16 = arith.cmpi ne, %15, %c0_i32_12 : i32
    scf.if %16 {
      %c0_13 = arith.constant 0 : index
      %c0_14 = arith.constant 0 : index
      %17 = vector.load %arg12[%c0_13, %c0_14] : memref<8x8xf32, #tpu.memory_space<vmem>>, vector<8x8xf32>
      %c0_15 = arith.constant 0 : index
      %c0_16 = arith.constant 0 : index
      %18 = vector.load %arg5[%c0_15, %c0_16] : memref<8x1xf32, #tpu.memory_space<vmem>>, vector<8x1xf32>
      %c0_17 = arith.constant 0 : index
      %c0_18 = arith.constant 0 : index
      %19 = vector.load %arg6[%c0_17, %c0_18] : memref<1x8xf32, #tpu.memory_space<vmem>>, vector<1x8xf32>
      %c0_19 = arith.constant 0 : index
      %c0_20 = arith.constant 0 : index
      %20 = vector.load %arg7[%c0_19, %c0_20] : memref<8x1xf32, #tpu.memory_space<vmem>>, vector<8x1xf32>
      %c0_21 = arith.constant 0 : index
      %c0_22 = arith.constant 0 : index
      %21 = vector.load %arg8[%c0_21, %c0_22] : memref<1x8xf32, #tpu.memory_space<vmem>>, vector<1x8xf32>
      %22 = vector.broadcast %18 : vector<8x1xf32> to vector<8x8xf32>
      %23 = vector.broadcast %19 : vector<1x8xf32> to vector<8x8xf32>
      %24 = arith.addf %22, %23 : vector<8x8xf32>
      %cst_23 = arith.constant 2.000000e+00 : f32
      %25 = vector.broadcast %cst_23 : f32 to vector<8x8xf32>
      %26 = arith.mulf %25, %17 : vector<8x8xf32>
      %27 = arith.subf %24, %26 : vector<8x8xf32>
      %cst_24 = arith.constant 2.000000e+00 : f32
      %cst_25 = arith.constant 9.99999997E-7 : f32
      %28 = arith.mulf %cst_24, %cst_25 : f32
      %29 = vector.broadcast %21 : vector<1x8xf32> to vector<8x8xf32>
      %30 = vector.broadcast %20 : vector<8x1xf32> to vector<8x8xf32>
      %31 = arith.subf %29, %30 : vector<8x8xf32>
      %32 = vector.broadcast %28 : f32 to vector<8x8xf32>
      %33 = arith.mulf %32, %31 : vector<8x8xf32>
      %34 = arith.addf %27, %33 : vector<8x8xf32>
      %cst_26 = arith.constant 3.200000e+01 : f32
      %cst_27 = arith.constant 9.99999997E-7 : f32
      %35 = arith.mulf %cst_26, %cst_27 : f32
      %cst_28 = arith.constant 9.99999997E-7 : f32
      %36 = arith.mulf %35, %cst_28 : f32
      %37 = vector.broadcast %36 : f32 to vector<8x8xf32>
      %38 = arith.addf %34, %37 : vector<8x8xf32>
      %cst_29 = arith.constant 0.000000e+00 : f32
      %39 = vector.broadcast %cst_29 : f32 to vector<8x8xf32>
      %40 = arith.maximumf %38, %39 : vector<8x8xf32>
      %41 = math.sqrt %40 : vector<8x8xf32>
      %cst_30 = arith.constant 1.000000e+00 : f32
      %42 = vector.broadcast %cst_30 : f32 to vector<8x8xf32>
      %43 = arith.subf %42, %41 : vector<8x8xf32>
      %cst_31 = arith.constant 0.000000e+00 : f32
      %44 = vector.broadcast %cst_31 : f32 to vector<8x8xf32>
      %45 = arith.maximumf %43, %44 : vector<8x8xf32>
      %46 = tpu.iota {dimensions = array<i32: 0>} : vector<8x8xi32>
      %c8_i32 = arith.constant 8 : i32
      %47 = arith.muli %arg0, %c8_i32 : i32
      %48 = vector.broadcast %47 : i32 to vector<8x8xi32>
      %49 = arith.addi %46, %48 : vector<8x8xi32>
      %50 = tpu.iota {dimensions = array<i32: 1>} : vector<8x8xi32>
      %c8_i32_32 = arith.constant 8 : i32
      %51 = arith.muli %arg1, %c8_i32_32 : i32
      %52 = vector.broadcast %51 : i32 to vector<8x8xi32>
      %53 = arith.addi %50, %52 : vector<8x8xi32>
      %54 = arith.cmpi ne, %49, %53 : vector<8x8xi32>
      %c0_33 = arith.constant 0 : index
      %c0_34 = arith.constant 0 : index
      %55 = vector.load %arg9[%c0_33, %c0_34] : memref<8x1xi32, #tpu.memory_space<vmem>>, vector<8x1xi32>
      %c0_35 = arith.constant 0 : index
      %c0_36 = arith.constant 0 : index
      %56 = vector.load %arg10[%c0_35, %c0_36] : memref<1x8xi32, #tpu.memory_space<vmem>>, vector<1x8xi32>
      %57 = vector.broadcast %55 : vector<8x1xi32> to vector<8x8xi32>
      %58 = vector.broadcast %56 : vector<1x8xi32> to vector<8x8xi32>
      %59 = arith.cmpi eq, %57, %58 : vector<8x8xi32>
      %60 = arith.mulf %45, %45 : vector<8x8xf32>
      %61 = arith.select %59, %40, %60 : vector<8x8xi1>, vector<8x8xf32>
      %cst_37 = arith.constant 0.000000e+00 : f32
      %62 = vector.broadcast %cst_37 : f32 to vector<8x8xf32>
      %63 = arith.select %54, %61, %62 : vector<8x8xi1>, vector<8x8xf32>
      %c0_38 = arith.constant 0 : index
      %c0_39 = arith.constant 0 : index
      %64 = vector.load %arg11[%c0_38, %c0_39] : memref<8x1xf32, #tpu.memory_space<vmem>>, vector<8x1xf32>
      %cst_40 = arith.constant dense<0.000000e+00> : vector<8xf32>
      %65 = vector.multi_reduction <add>, %63, %cst_40 [1] : vector<8x8xf32> to vector<8xf32>
      %66 = vector.shape_cast %65 : vector<8xf32> to vector<8x1xf32>
      %67 = arith.addf %64, %66 : vector<8x1xf32>
      %c0_41 = arith.constant 0 : index
      %c0_42 = arith.constant 0 : index
      %68 = vector.load %arg11[%c0_41, %c0_42] : memref<8x1xf32, #tpu.memory_space<vmem>>, vector<8x1xf32>
      tpu.vector_store %arg11[%c0_41, %c0_42], %67 {strides = array<i32>} : memref<8x1xf32, #tpu.memory_space<vmem>>, vector<8x1xf32>,
    } else {
    }
    return
  }
  func.func @transform_0(%arg0: i32, %arg1: i32, %arg2: i32) -> (i32, i32) {
    %c0_i32 = arith.constant 0 : i32
    return %arg0, %arg2 : i32, i32
  }
  func.func @transform_1(%arg0: i32, %arg1: i32, %arg2: i32) -> (i32, i32) {
    %c0_i32 = arith.constant 0 : i32
    return %arg1, %arg2 : i32, i32
  }
  func.func @transform_2(%arg0: i32, %arg1: i32, %arg2: i32) -> (i32, i32) {
    %c0_i32 = arith.constant 0 : i32
    %c0_i32_0 = arith.constant 0 : i32
    return %arg0, %c0_i32 : i32, i32
  }
  func.func @transform_3(%arg0: i32, %arg1: i32, %arg2: i32) -> (i32, i32) {
    %c0_i32 = arith.constant 0 : i32
    %c0_i32_0 = arith.constant 0 : i32
    return %c0_i32, %arg1 : i32, i32
  }
  func.func @transform_4(%arg0: i32, %arg1: i32, %arg2: i32) -> (i32, i32) {
    %c0_i32 = arith.constant 0 : i32
    %c0_i32_0 = arith.constant 0 : i32
    return %arg0, %c0_i32 : i32, i32
  }
  func.func @transform_5(%arg0: i32, %arg1: i32, %arg2: i32) -> (i32, i32) {
    %c0_i32 = arith.constant 0 : i32
    %c0_i32_0 = arith.constant 0 : i32
    return %c0_i32, %arg1 : i32, i32
  }
  func.func @transform_6(%arg0: i32, %arg1: i32, %arg2: i32) -> (i32, i32) {
    %c0_i32 = arith.constant 0 : i32
    %c0_i32_0 = arith.constant 0 : i32
    return %arg0, %c0_i32 : i32, i32
  }
  func.func @transform_7(%arg0: i32, %arg1: i32, %arg2: i32) -> (i32, i32) {
    %c0_i32 = arith.constant 0 : i32
    %c0_i32_0 = arith.constant 0 : i32
    return %c0_i32, %arg1 : i32, i32
  }
  func.func @transform_8(%arg0: i32, %arg1: i32, %arg2: i32) -> (i32, i32) {
    %c0_i32 = arith.constant 0 : i32
    %c0_i32_0 = arith.constant 0 : i32
    return %arg0, %c0_i32 : i32, i32
  }
}

</mosaic_0001>

<llo_original>
// kernel: tpu_custom_call.1
$region0: #{tpu_custom_call.1}
  #allocation0 [shape = 'u32[]', space=smem, size = 0x4, offset = 0x4, fixed_abs, tag = 'smem constant byte address 0x4 - core index']
  #allocation1 [shape = 'u32[144,128]{1,0:T(1,128)}', space=vmem, size = 0x12000, scoped, tag = 'internal scratch']
  #allocation2 [shape = 'f32[8,8]{1,0:T(8,128)}', space=vmem, size = 0x1000, scoped, tag = 'scratch operand']
  %s0 = inlined_call_operand.vmem [shape: f32[8,32], index: 0, kind: input, shape index: {}]
  %s1 = inlined_call_operand.vmem [shape: f32[8,32], index: 1, kind: input, shape index: {}]
  %s2 = inlined_call_operand.vmem [shape: f32[8,1], index: 2, kind: input, shape index: {}]
  %s3 = inlined_call_operand.vmem [shape: f32[1,8], index: 3, kind: input, shape index: {}]
  %s4 = inlined_call_operand.vmem [shape: f32[8,1], index: 4, kind: input, shape index: {}]
  %s5 = inlined_call_operand.vmem [shape: f32[1,8], index: 5, kind: input, shape index: {}]
  %s6 = inlined_call_operand.vmem [shape: s32[8,1], index: 6, kind: input, shape index: {}]
  %s7 = inlined_call_operand.vmem [shape: s32[1,8], index: 7, kind: input, shape index: {}]
  %s8 = inlined_call_operand.vmem [shape: f32[8,1], index: 8, kind: output, shape index: {}]
  %s9 = sld [smem:[#allocation0]]
  $region54: #{tpu_custom_call.1} parent=0
    _
  %s11 = ssub.s32 1, %s9
  %s12 = scalar_select 0, %s11, %s9
  // Predicated region
  $region2: #{tpu_custom_call.1} parent=0 // pred_check
    _
  $region3: #{tpu_custom_call.1} parent=0 // pred_check_branch
    %14 = sbr.rel (0) target = $region5
  $region4: #{tpu_custom_call.1} parent=0 // pred_region
    _
  $region5: #{tpu_custom_call.1} parent=0 // pred_fallthru
    _
  // Predicated region
  $region6: #{tpu_custom_call.1} parent=0 // pred_check
    _
  $region7: #{tpu_custom_call.1} parent=0 // pred_check_branch
    %16 = sbr.rel (0) target = $region9
  $region8: #{tpu_custom_call.1} parent=0 // pred_region
    _
  $region9: #{tpu_custom_call.1} parent=0 // pred_fallthru
    _
  // Predicated region
  $region10: #{tpu_custom_call.1} parent=0 // pred_check
    _
  $region11: #{tpu_custom_call.1} parent=0 // pred_check_branch
    %18 = sbr.rel (0) target = $region13
  $region12: #{tpu_custom_call.1} parent=0 // pred_region
    _
  $region13: #{tpu_custom_call.1} parent=0 // pred_fallthru
    _
  // Predicated region
  $region14: #{tpu_custom_call.1} parent=0 // pred_check
    _
  $region15: #{tpu_custom_call.1} parent=0 // pred_check_branch
    %20 = sbr.rel (0) target = $region17
  $region16: #{tpu_custom_call.1} parent=0 // pred_region
    _
  $region17: #{tpu_custom_call.1} parent=0 // pred_fallthru
    _
  // Predicated region
  $region18: #{tpu_custom_call.1} parent=0 // pred_check
    _
  $region19: #{tpu_custom_call.1} parent=0 // pred_check_branch
    %22 = sbr.rel (0) target = $region21
  $region20: #{tpu_custom_call.1} parent=0 // pred_region
    _
  $region21: #{tpu_custom_call.1} parent=0 // pred_fallthru
    _
  // Predicated region
  $region22: #{tpu_custom_call.1} parent=0 // pred_check
    _
  $region23: #{tpu_custom_call.1} parent=0 // pred_check_branch
    %24 = sbr.rel (0) target = $region25
  $region24: #{tpu_custom_call.1} parent=0 // pred_region
    _
  $region25: #{tpu_custom_call.1} parent=0 // pred_fallthru
    _
  // Predicated region
  $region26: #{tpu_custom_call.1} parent=0 // pred_check
    _
  $region27: #{tpu_custom_call.1} parent=0 // pred_check_branch
    %26 = sbr.rel (0) target = $region29
  $region28: #{tpu_custom_call.1} parent=0 // pred_region
    _
  $region29: #{tpu_custom_call.1} parent=0 // pred_fallthru
    _
  // Predicated region
  $region30: #{tpu_custom_call.1} parent=0 // pred_check
    _
  $region31: #{tpu_custom_call.1} parent=0 // pred_check_branch
    %28 = sbr.rel (0) target = $region33
  $region32: #{tpu_custom_call.1} parent=0 // pred_region
    _
  $region33: #{tpu_custom_call.1} parent=0 // pred_fallthru
    _
  %p29 = scmp.eq.s32.totalorder 0, 0
  %p30 = scmp.eq.s32.totalorder 0, 0
  %p31 = pnand %p29, %p30
  %p32 = pneg %p31
  // Predicated region
  $region34: #{tpu_custom_call.1} parent=0 // pred_check
    _
  $region35: #{tpu_custom_call.1} parent=0 // pred_check_branch
    %34 = sbr.rel (%p31) target = $region37
  $region36: #{tpu_custom_call.1} parent=0 // pred_region
    %vm35 = vcmask 7168
    %36 = vst.msk [vmem:[%s8] sm:$0xff] %vm35, 0.0
  $region37: #{tpu_custom_call.1} parent=0 // pred_fallthru
    _
  // Predicated region
  $region38: #{tpu_custom_call.1} parent=0 // pred_check
    %p37 = pneg %p30
  $region39: #{tpu_custom_call.1} parent=0 // pred_check_branch
    %39 = sbr.rel (%p37) target = $region41
  $region40: #{tpu_custom_call.1} parent=0 // pred_region
    %vm40 = vcmask 64512
    %41 = vst.msk [vmem:[#allocation2] sm:$0xff] %vm40, 0.0
  $region41: #{tpu_custom_call.1} parent=0 // pred_fallthru
    _
  %v42 = vld [vmem:[#allocation2] sm:$0xff]
  %v43 = vld [vmem:[%s0] sm:$0xff]
  %v44 = vld [vmem:[%s1] sm:$0xff]
  %vm45 = vcmask 261120
  %v47 = vsel %vm45, %v43, 0
  %v50 = vsel %vm45, %v44, 0
  %52 = vmatprep.subr.mxu0 0.0
  %53 = vmatpush1.xpose.msra.mxu0 %v50
  %54 = vmatprep.subr.mxu0 0.0
  %55 = vmatpush1.xpose.msra.mxu0 0.0
  %56 = vmatprep.subr.mxu0 0.0
  %57 = vmatpush1.xpose.msra.mxu0 0.0
  %58 = vmatprep.subr.mxu0 0.0
  %59 = vmatpush1.xpose.msra.mxu0 0.0
  %60 = vmatprep.subr.mxu0 0.0
  %61 = vmatpush1.xpose.msra.mxu0 0.0
  %62 = vmatprep.subr.mxu0 0.0
  %63 = vmatpush1.xpose.msra.mxu0 0.0
  %64 = vmatprep.subr.mxu0 0.0
  %65 = vmatpush1.xpose.msra.mxu0 0.0
  %66 = vmatprep.subr.mxu0 0.0
  %67 = vmatpush1.xpose.msra.mxu0 0.0
  %68 = vmatprep.subr.mxu0 0.0
  %69 = vmatpush1.xpose.msra.mxu0 0.0
  %70 = vmatprep.subr.mxu0 0.0
  %71 = vmatpush1.xpose.msra.mxu0 0.0
  %72 = vmatprep.subr.mxu0 0.0
  %73 = vmatpush1.xpose.msra.mxu0 0.0
  %74 = vmatprep.subr.mxu0 0.0
  %75 = vmatpush1.xpose.msra.mxu0 0.0
  %76 = vmatprep.subr.mxu0 0.0
  %77 = vmatpush1.xpose.msra.mxu0 0.0
  %78 = vmatprep.subr.mxu0 0.0
  %79 = vmatpush1.xpose.msra.mxu0 0.0
  %80 = vmatprep.subr.mxu0 0.0
  %81 = vmatpush1.xpose.msra.mxu0 0.0
  %82 = vmatprep.subr.mxu0 0.0
  %83 = vmatpush1.xpose.msra.mxu0 0.0
  %84 = vmatprep.subr.mxu0 0.0
  %85 = vmatpush1.xpose.msra.mxu0 0.0
  %86 = vmatprep.subr.mxu0 0.0
  %87 = vmatpush1.xpose.msra.mxu0 0.0
  %88 = vmatprep.subr.mxu0 0.0
  %89 = vmatpush1.xpose.msra.mxu0 0.0
  %90 = vmatprep.subr.mxu0 0.0
  %91 = vmatpush1.xpose.msra.mxu0 0.0
  %92 = vmatprep.subr.mxu0 0.0
  %93 = vmatpush1.xpose.msra.mxu0 0.0
  %94 = vmatprep.subr.mxu0 0.0
  %95 = vmatpush1.xpose.msra.mxu0 0.0
  %96 = vmatprep.subr.mxu0 0.0
  %97 = vmatpush1.xpose.msra.mxu0 0.0
  %98 = vmatprep.subr.mxu0 0.0
  %99 = vmatpush1.xpose.msra.mxu0 0.0
  %100 = vmatprep.subr.mxu0 0.0
  %101 = vmatpush1.xpose.msra.mxu0 0.0
  %102 = vmatprep.subr.mxu0 0.0
  %103 = vmatpush1.xpose.msra.mxu0 0.0
  %104 = vmatprep.subr.mxu0 0.0
  %105 = vmatpush1.xpose.msra.mxu0 0.0
  %106 = vmatprep.subr.mxu0 0.0
  %107 = vmatpush1.xpose.msra.mxu0 0.0
  %108 = vmatprep.subr.mxu0 0.0
  %109 = vmatpush1.xpose.msra.mxu0 0.0
  %110 = vmatprep.subr.mxu0 0.0
  %111 = vmatpush1.xpose.msra.mxu0 0.0
  %112 = vmatprep.subr.mxu0 0.0
  %113 = vmatpush1.xpose.msra.mxu0 0.0
  %114 = vmatprep.subr.mxu0 0.0
  %115 = vmatpush1.xpose.msra.mxu0 0.0
  %116 = vmatprep.mubr.f32.mxu0 0.0
  %117 = vmatmul.mubr.f32.gmra.mrb[0].mxu0 %v47
  %v118 = vpop.f32.mrb[0].mxu0
  %v119 = vadd.f32 0.0, %v118
  %v120 = vpop.f32.mrb[0].mxu0
  %121 = vdwg.mxu0
  %v122 = vadd.f32 %v42, %v119
  %vm123 = vcmask 64512
  %124 = vst.msk [vmem:[#allocation2] sm:$0xff] %vm123, %v122
  // Predicated region
  $region42: #{tpu_custom_call.1} parent=0 // pred_check
    %p125 = pneg %p30
  $region43: #{tpu_custom_call.1} parent=0 // pred_check_branch
    %127 = sbr.rel (%p125) target = $region45
  $region44: #{tpu_custom_call.1} parent=0 // pred_region
    %v128 = vld [vmem:[#allocation2] sm:$0xff]
    %v129 = vld [vmem:[%s2] sm:$0xff]
    %v130 = vld [vmem:[%s3] sm:$0x1]
    %v131 = vld [vmem:[%s4] sm:$0xff]
    %v132 = vld [vmem:[%s5] sm:$0x1]
    %134 = vset.pattern.permute.xlu0 0
    %135 = vperm.xlu0 %134, %v129
    %v136 = vpop.permute.xlu0 %135
    %v139 = vlaneseq
    %v140 = vshrl.u32 %v139, 7
    %v141 = vsub.s32 0, %v140
    %v142 = vrot.slane %v130, %v141
    %v144 = vadd.f32 %v136, %v142
    %v145 = vmul.f32 %v128, 2.0
    %v146 = vsub.f32 %v144, %v145
    %v148 = vlaneseq
    %v149 = vshrl.u32 %v148, 7
    %v150 = vsub.s32 0, %v149
    %v151 = vrot.slane %v132, %v150
    %154 = vset.pattern.permute.xlu0 0
    %155 = vperm.xlu0 %154, %v131
    %v156 = vpop.permute.xlu0 %155
    %v158 = vsub.f32 %v151, %v156
    %v159 = vmul.f32 %v158, 2e-06
    %v160 = vadd.f32 %v146, %v159
    %v161 = vadd.f32 %v160, 3.2e-11
    %v162 = vmax.f32 %v161, 0.0
    %v163 = vrsqrt.pop %v162
    %v164 = vmul.f32 %v162, %v163
    %vm165 = vcmp.eq.f32.partialorder %v162, inf
    %v166 = vsel %vm165, %v162, %v164
    %vm167 = vcmp.eq.f32.partialorder %v162, 0.0
    %v168 = vand.u32 %v162, 2147483648
    %v169 = vsel %vm167, %v168, %v166
    %v170 = vsub.f32 1.0, %v169
    %v171 = vmax.f32 %v170, 0.0
    %v172 = vlaneseq
    %v173 = vshrl.u32 %v172, 7
    %s174 = smul.u32 0, 8
    %v175 = vstv %s174
    %v176 = vadd.s32 %v173, %v175
    %v177 = vlaneseq
    %v178 = vand.u32 %v177, 127
    %s179 = smul.u32 0, 8
    %v180 = vstv %s179
    %v181 = vadd.s32 %v178, %v180
    %vm182 = vcmp.ne.s32.totalorder %v176, %v181
    %v183 = vld [vmem:[%s6] sm:$0xff]
    %v184 = vld [vmem:[%s7] sm:$0x1]
    %185 = vset.pattern.permute.xlu0 0
    %186 = vperm.xlu0 %185, %v183
    %v187 = vpop.permute.xlu0 %186
    %v188 = vlaneseq
    %v189 = vshrl.u32 %v188, 7
    %v190 = vsub.s32 0, %v189
    %v191 = vrot.slane %v184, %v190
    %vm192 = vcmp.eq.s32.totalorder %v187, %v191
    %v193 = vmul.f32 %v171, %v171
    %v194 = vsel %vm192, %v162, %v193
    %v195 = vsel %vm182, %v194, 0.0
    %v196 = vld [vmem:[%s8] sm:$0xff]
    %v197 = vsel %vm123, %v195, 0.0
    %198 = vadd.xlane.f32.xlu0 %v197
    %v199 = vpop.xlane.xlu0 %198
    %v200 = vadd.f32 %v196, %v199
    %vm201 = vcmask 7168
    %202 = vst.msk [vmem:[%s8] sm:$0xff] %vm201, %v200
  $region45: #{tpu_custom_call.1} parent=0 // pred_fallthru
    _
  // Predicated region
  $region46: #{tpu_custom_call.1} parent=0 // pred_check
    _
  $region47: #{tpu_custom_call.1} parent=0 // pred_check_branch
    %204 = sbr.rel (0) target = $region49
  $region48: #{tpu_custom_call.1} parent=0 // pred_region
    _
  $region49: #{tpu_custom_call.1} parent=0 // pred_fallthru
    _
  // Predicated region
  $region50: #{tpu_custom_call.1} parent=0 // pred_check
    _
  $region51: #{tpu_custom_call.1} parent=0 // pred_check_branch
    %206 = sbr.rel (0) target = $region53
  $region52: #{tpu_custom_call.1} parent=0 // pred_region
    _
  $region53: #{tpu_custom_call.1} parent=0 // pred_fallthru
    _

</llo_original>
